<compile_context>
chip_gen: v5e
topology: v5e:2x2
jax: 0.10.0
libtpu: 0.0.40
codegen_flags: <defaults>
</compile_context>

<pallas_src>
import functools

import jax
import jax.numpy as jnp
from jax.experimental import pallas as pl
from jax.experimental.pallas import tpu as pltpu


def _round_up(x, m):
    return (x + m - 1) // m * m


# ---------------------------------------------------------------------------
# Prototype / embedding loss: relu(P @ P.T - 0.14).mean()
# P is tiny ((C, D)) so a single un-gridded call with the whole block in VMEM
# is optimal; the scalar result goes straight to SMEM.
# ---------------------------------------------------------------------------
def _proto_kernel(proto_ref, emb_ref):
    p = proto_ref[...].astype(jnp.float32)                       # (Kp, D)
    # Contract over D directly on the MXU, no materialized p.T (no XLU transpose).
    gram = jax.lax.dot_general(
        p, p, dimension_numbers=(((1,), (1,)), ((), ())),
        preferred_element_type=jnp.float32)                      # (Kp, Kp)
    rect = jnp.maximum(gram - 0.14, 0.0)
    inv = 1.0 / float(gram.shape[0] * gram.shape[1])             # compile-time constant
    emb_ref[0, 0] = jnp.sum(rect) * inv


def _proto_loss(proto_tail):
    out = pl.pallas_call(
        _proto_kernel,
        out_shape=jax.ShapeDtypeStruct((1, 1), jnp.float32),
        in_specs=[pl.BlockSpec(memory_space=pltpu.MemorySpace.VMEM)],
        out_specs=pl.BlockSpec(memory_space=pltpu.MemorySpace.SMEM),
    )(proto_tail)
    return out[0, 0]


# ---------------------------------------------------------------------------
# Cross entropy (unit class weights, ignore_index=-1), one tile of TN samples.
#   logits_ref: (TN, C) native dtype -- raw slice of the (N, C) logits.
#   labels_ref: (1, TN) int32
#   out_ref:    (1, 1, 128) f32; lane 0 <- sum of -log p[target], lane 1 <- count
# ---------------------------------------------------------------------------
def _ce_kernel(logits_ref, labels_ref, out_ref, *, n_total):
    x = logits_ref[...].astype(jnp.float32)                      # (TN, C), in-kernel upcast
    tn, c = x.shape

    # MXU-based transpose: lt[cls, n] = x[n, cls].  Identity matmul contracting
    # over C (A @ B.T pattern) -- no XLU relayout, negligible MXU work, and
    # exact in f32 with HIGHEST precision.
    eye = (jax.lax.broadcasted_iota(jnp.int32, (c, c), 0)
           == jax.lax.broadcasted_iota(jnp.int32, (c, c), 1)).astype(jnp.float32)
    lt = jax.lax.dot_general(
        eye, x, dimension_numbers=(((1,), (1,)), ((), ())),
        preferred_element_type=jnp.float32,
        precision=jax.lax.Precision.HIGHEST)                     # (C, TN) lane-dense

    labels = labels_ref[...]                                     # (1, TN) int32

    m = jnp.max(lt, axis=0, keepdims=True)                       # (1, TN)  sublane reduce
    z = lt - m
    lse = jnp.log(jnp.sum(jnp.exp(z), axis=0, keepdims=True))    # (1, TN)  EUP exp/log
    # TODO(synk): on v6e/v7x the exp could run in bf16 (EUP bf16 path) for ~2x
    # transcendental throughput; kept f32 for exact parity with the reference.

    cls_idx = jax.lax.broadcasted_iota(jnp.int32, lt.shape, 0)   # (C, TN)
    picked_z = jnp.sum(jnp.where(cls_idx == labels, z, 0.0),
                       axis=0, keepdims=True)                    # (1, TN)
    picked = picked_z - lse                                      # log p[target], no full logprob

    # Validity mask: ignore_index == -1 and in-bounds.  Ragged tail tiles hold
    # unspecified data -> must use where(), never multiply-masking.
    col = jax.lax.broadcasted_iota(jnp.int32, labels.shape, 1)   # (1, TN)
    in_bounds = (pl.program_id(0) * tn + col) < n_total
    valid = jnp.logical_and(labels != -1, in_bounds)
    # TODO(synk): labels outside [0, C) other than -1 are counted as valid with
    # zero contribution (PyTorch would raise); add pl.debug_check if needed.

    nll = -jnp.sum(jnp.where(valid, picked, 0.0))
    cnt = jnp.sum(jnp.where(valid, 1.0, 0.0))

    lane = jax.lax.broadcasted_iota(jnp.int32, out_ref.shape, 2)  # (1, 1, 128)
    out_ref[...] = jnp.where(
        lane == 0, jnp.broadcast_to(nll, out_ref.shape),
        jnp.where(lane == 1, jnp.broadcast_to(cnt, out_ref.shape), 0.0))


def osdan_loss_clsemb(proto, outcls, label_flatten, *, wcls, wemb, wrej=0.0,
                      reduction="mean", block_n=None):
    # TODO(synk): wrej / reduction are stored but unused in the PyTorch forward;
    # kept only for signature parity.
    del wrej, reduction
    N, C = outcls.shape
    itemsize = jnp.dtype(outcls.dtype).itemsize

    # ---- class loss (cross entropy, unit weights, ignore_index=-1) ----
    if block_n is None:
        n_pad128 = _round_up(max(N, 1), 128)
        # The (block_n, C) input block is lane-padded to 128 in VMEM; budget
        # ~2 MiB of *VMEM* per buffer (x2 double-buffering) -- comfortably
        # inside the 32 MiB scoped default on v5e/v6e/v7x.
        lanes_pad = _round_up(C, 128)
        target_vmem = 2 * 1024 * 1024
        tn_cap = max(128, (target_vmem // (lanes_pad * itemsize)) // 128 * 128)
        # >= 2 tiles whenever N spans more than one 128-row chunk so the
        # parallel grid axis can use both TensorCores on v7x.
        two_way = max(128, _round_up(pl.cdiv(n_pad128, 2), 128))
        block_n = min(tn_cap, two_way)
    block_n = max(128, _round_up(block_n, 128))
    num_tiles = pl.cdiv(N, block_n)

    # Free reshape only (no HBM pass): labels as a lane-dense (1, N) row.
    labels2d = label_flatten.astype(jnp.int32).reshape(1, N)

    cost = pl.CostEstimate(
        flops=int(2 * C * C * N + 8 * N * C),          # MXU transpose + VPU elementwise
        transcendentals=int(N * C + N),                # exp + log
        bytes_accessed=int(N * C * itemsize + N * 4 + num_tiles * 128 * 4),
    )

    parts = pl.pallas_call(
        functools.partial(_ce_kernel, n_total=N),
        out_shape=jax.ShapeDtypeStruct((num_tiles, 1, 128), jnp.float32),
        grid=(num_tiles,),
        in_specs=[
            pl.BlockSpec((block_n, C), lambda i: (i, 0)),   # raw logits slice, native dtype
            pl.BlockSpec((1, block_n), lambda i: (0, i)),   # labels row
        ],
        out_specs=pl.BlockSpec((1, 1, 128), lambda i: (i, 0, 0)),
        compiler_params=pltpu.CompilerParams(
            dimension_semantics=("parallel",)),             # both TCs on v7x
        cost_estimate=cost,
    )(outcls, labels2d)

    nll_total = jnp.sum(parts[:, 0, 0])
    count = jnp.sum(parts[:, 0, 1])
    # TODO(synk): if every label is -1 this is 0/0 = NaN, matching PyTorch's
    # CrossEntropyLoss(reduction='mean') behaviour when all targets are ignored.
    clsloss = nll_total / count

    # ---- prototype / embedding loss (statically skipped when wemb == 0) ----
    if wemb > 0:
        protoloss = _proto_loss(proto[1:])
    else:
        protoloss = jnp.float32(0.0)

    loss = clsloss * jnp.float32(wcls) + jnp.float32(wemb) * protoloss

    # TODO(synk): PyTorch returns python floats via .item(); we return device
    # scalars instead to avoid a host sync per call and keep the wrapper jit-able.
    terms = {"total": loss, "main": clsloss, "emb": protoloss}
    return loss, terms


def _reference(proto, outcls, label_flatten, wcls, wemb):
    # Pure-JAX reference for sanity checking.
    pt = proto[1:].astype(jnp.float32)
    proto_loss = jnp.mean(jnp.maximum(pt @ pt.T - 0.14, 0.0)) if wemb > 0 else jnp.float32(0.0)
    logits = outcls.astype(jnp.float32)
    logp = jax.nn.log_softmax(logits, axis=-1)
    lbl = label_flatten.astype(jnp.int32)
    valid = lbl != -1
    safe = jnp.where(valid, lbl, 0)
    picked = jnp.take_along_axis(logp, safe[:, None], axis=-1)[:, 0]
    clsloss = -jnp.sum(jnp.where(valid, picked, 0.0)) / jnp.sum(valid.astype(jnp.float32))
    return clsloss * wcls + wemb * proto_loss


if __name__ == "__main__":
    key = jax.random.PRNGKey(0)
    k1, k2, k3 = jax.random.split(key, 3)

    # cfgs
    wcls, wemb, wrej, reduction = 1.0, 0.3, 0.1, "mean"

    # small shapes: D=32 embedding dim, C=8 classes, proto has C+1 rows, N=16 samples
    D, C, N = 32, 8, 16
    proto = jax.random.normal(k1, (C + 1, D), dtype=jnp.float32)
    outcls = jax.random.normal(k2, (N, C), dtype=jnp.float32)
    labels = jax.random.randint(k3, (N,), 0, C, dtype=jnp.int32)
    labels = labels.at[3].set(-1)  # exercise ignore_index=-1

    loss_fn = jax.jit(functools.partial(
        osdan_loss_clsemb, wcls=wcls, wemb=wemb, wrej=wrej, reduction=reduction))
    loss, terms = loss_fn(proto, outcls, labels)
    loss = jax.block_until_ready(loss)

    ref = jax.block_until_ready(_reference(proto, outcls, labels, wcls, wemb))
    # Slightly loose tolerance leaves margin for MXU f32 accumulation order.
    assert jnp.allclose(loss, ref, rtol=2e-5, atol=2e-5), (loss, ref)
    recombined = terms["main"] * wcls + wemb * terms["emb"]
    assert jnp.allclose(recombined, loss, rtol=2e-5, atol=2e-5)

    # Second config: N not a multiple of 128, several grid tiles with a ragged
    # tail, wemb == 0 path.
    k4, k5, k6 = jax.random.split(jax.random.PRNGKey(1), 3)
    C2, N2 = 12, 300
    proto2 = jax.random.normal(k4, (C2 + 1, D), dtype=jnp.float32)
    outcls2 = jax.random.normal(k5, (N2, C2), dtype=jnp.float32)
    labels2 = jax.random.randint(k6, (N2,), 0, C2, dtype=jnp.int32)
    labels2 = labels2.at[7].set(-1)

    loss2, _ = osdan_loss_clsemb(proto2, outcls2, labels2, wcls=2.0, wemb=0.0,
                                 block_n=128)
    loss2 = jax.block_until_ready(loss2)
    ref2 = jax.block_until_ready(_reference(proto2, outcls2, labels2, 2.0, 0.0))
    assert jnp.allclose(loss2, ref2, rtol=2e-5, atol=2e-5), (loss2, ref2)

    print("KERNEL_OK")
</pallas_src>

<mosaic_0001>
module attributes {stable_mosaic.version = 11 : i64} {
  func.func @_ce_kernel(%arg0: i32, %arg1: memref<128x8xf32, #tpu.memory_space<vmem>>, %arg2: memref<1x128xi32, #tpu.memory_space<vmem>>, %arg3: memref<1x1x128xf32, #tpu.memory_space<vmem>>) attributes {dimension_semantics = [#tpu.dimension_semantics<parallel>], iteration_bounds = array<i64: 1>, scalar_prefetch = 0 : i64, scratch_operands = 0 : i64, tpu.core_type = #tpu.core_type<tc>, window_params = [{transform_indices = @transform_0, window_bounds = array<i64: 128, 8>}, {transform_indices = @transform_1, window_bounds = array<i64: 1, 128>}, {transform_indices = @transform_2, window_bounds = array<i64: 1, 1, 128>}]} {
    %c0 = arith.constant 0 : index
    %c0_0 = arith.constant 0 : index
    %0 = vector.load %arg1[%c0, %c0_0] : memref<128x8xf32, #tpu.memory_space<vmem>>, vector<128x8xf32>
    %1 = tpu.iota {dimensions = array<i32: 0>} : vector<8x8xi32>
    %2 = tpu.iota {dimensions = array<i32: 1>} : vector<8x8xi32>
    %3 = arith.cmpi eq, %1, %2 : vector<8x8xi32>
    %4 = arith.extui %3 : vector<8x8xi1> to vector<8x8xi32>
    %5 = arith.sitofp %4 : vector<8x8xi32> to vector<8x8xf32>
    %cst = arith.constant dense<0.000000e+00> : vector<8x128xf32>
    %6 = tpu.matmul %5, %0, %cst {dimension_numbers = #tpu.dot_dimension_numbers<[1], [1], [0], [0], [0, 0, 1, 0], [], []>, precision = #tpu.contract_precision<fp32>} : vector<8x8xf32>, vector<128x8xf32>, vector<8x128xf32> -> vector<8x128xf32>
    %c0_1 = arith.constant 0 : index
    %c0_2 = arith.constant 0 : index
    %7 = vector.load %arg2[%c0_1, %c0_2] : memref<1x128xi32, #tpu.memory_space<vmem>>, vector<1x128xi32>
    %cst_3 = arith.constant dense<0xFF800000> : vector<128xf32>
    %8 = vector.multi_reduction <maximumf>, %6, %cst_3 [0] : vector<8x128xf32> to vector<128xf32>
    %9 = vector.shape_cast %8 : vector<128xf32> to vector<1x128xf32>
    %10 = vector.broadcast %9 : vector<1x128xf32> to vector<8x128xf32>
    %11 = arith.subf %6, %10 : vector<8x128xf32>
    %12 = math.exp %11 : vector<8x128xf32>
    %cst_4 = arith.constant dense<0.000000e+00> : vector<128xf32>
    %13 = vector.multi_reduction <add>, %12, %cst_4 [0] : vector<8x128xf32> to vector<128xf32>
    %14 = vector.shape_cast %13 : vector<128xf32> to vector<1x128xf32>
    %15 = math.log %14 : vector<1x128xf32>
    %16 = tpu.iota {dimensions = array<i32: 0>} : vector<8x128xi32>
    %17 = vector.broadcast %7 : vector<1x128xi32> to vector<8x128xi32>
    %18 = arith.cmpi eq, %16, %17 : vector<8x128xi32>
    %cst_5 = arith.constant 0.000000e+00 : f32
    %19 = vector.broadcast %cst_5 : f32 to vector<8x128xf32>
    %20 = arith.select %18, %11, %19 : vector<8x128xi1>, vector<8x128xf32>
    %cst_6 = arith.constant dense<0.000000e+00> : vector<128xf32>
    %21 = vector.multi_reduction <add>, %20, %cst_6 [0] : vector<8x128xf32> to vector<128xf32>
    %22 = vector.shape_cast %21 : vector<128xf32> to vector<1x128xf32>
    %23 = arith.subf %22, %15 : vector<1x128xf32>
    %24 = tpu.iota {dimensions = array<i32: 1>} : vector<1x128xi32>
    %c128_i32 = arith.constant 128 : i32
    %25 = arith.muli %arg0, %c128_i32 : i32
    %26 = vector.broadcast %25 : i32 to vector<1x128xi32>
    %27 = arith.addi %26, %24 : vector<1x128xi32>
    %c16_i32 = arith.constant 16 : i32
    %28 = vector.broadcast %c16_i32 : i32 to vector<1x128xi32>
    %29 = arith.cmpi slt, %27, %28 : vector<1x128xi32>
    %c-1_i32 = arith.constant -1 : i32
    %30 = vector.broadcast %c-1_i32 : i32 to vector<1x128xi32>
    %31 = arith.cmpi ne, %7, %30 : vector<1x128xi32>
    %32 = arith.andi %31, %29 : vector<1x128xi1>
    %cst_7 = arith.constant 0.000000e+00 : f32
    %33 = vector.broadcast %cst_7 : f32 to vector<1x128xf32>
    %34 = arith.select %32, %23, %33 : vector<1x128xi1>, vector<1x128xf32>
    %35 = vector.shape_cast %34 : vector<1x128xf32> to vector<1x1x128xf32>
    %cst_8 = arith.constant dense<0.000000e+00> : vector<1xf32>
    %36 = vector.multi_reduction <add>, %35, %cst_8 [1, 2] : vector<1x1x128xf32> to vector<1xf32>
    %37 = vector.shape_cast %36 : vector<1xf32> to vector<1x1x1xf32>
    %38 = vector.extract %37[0, 0, 0] : f32 from vector<1x1x1xf32>
    %cst_9 = arith.constant 0.000000e+00 : f32
    %39 = arith.subf %cst_9, %38 : f32
    %cst_10 = arith.constant 1.000000e+00 : f32
    %cst_11 = arith.constant 0.000000e+00 : f32
    %40 = vector.broadcast %cst_10 : f32 to vector<1x128xf32>
    %41 = vector.broadcast %cst_11 : f32 to vector<1x128xf32>
    %42 = arith.select %32, %40, %41 : vector<1x128xi1>, vector<1x128xf32>
    %43 = vector.shape_cast %42 : vector<1x128xf32> to vector<1x1x128xf32>
    %cst_12 = arith.constant dense<0.000000e+00> : vector<1xf32>
    %44 = vector.multi_reduction <add>, %43, %cst_12 [1, 2] : vector<1x1x128xf32> to vector<1xf32>
    %45 = vector.shape_cast %44 : vector<1xf32> to vector<1x1x1xf32>
    %46 = vector.extract %45[0, 0, 0] : f32 from vector<1x1x1xf32>
    %47 = tpu.iota {dimensions = array<i32: 2>} : vector<1x1x128xi32>
    %c0_i32 = arith.constant 0 : i32
    %48 = vector.broadcast %c0_i32 : i32 to vector<1x1x128xi32>
    %49 = arith.cmpi eq, %47, %48 : vector<1x1x128xi32>
    %50 = vector.broadcast %39 : f32 to vector<1x1x128xf32>
    %c1_i32 = arith.constant 1 : i32
    %51 = vector.broadcast %c1_i32 : i32 to vector<1x1x128xi32>
    %52 = arith.cmpi eq, %47, %51 : vector<1x1x128xi32>
    %53 = vector.broadcast %46 : f32 to vector<1x1x128xf32>
    %cst_13 = arith.constant 0.000000e+00 : f32
    %54 = vector.broadcast %cst_13 : f32 to vector<1x1x128xf32>
    %55 = arith.select %52, %53, %54 : vector<1x1x128xi1>, vector<1x1x128xf32>
    %56 = arith.select %49, %50, %55 : vector<1x1x128xi1>, vector<1x1x128xf32>
    %c0_14 = arith.constant 0 : index
    %c0_15 = arith.constant 0 : index
    %c0_16 = arith.constant 0 : index
    %57 = vector.load %arg3[%c0_14, %c0_15, %c0_16] : memref<1x1x128xf32, #tpu.memory_space<vmem>>, vector<1x1x128xf32>
    tpu.vector_store %arg3[%c0_14, %c0_15, %c0_16], %56 {strides = array<i32>} : memref<1x1x128xf32, #tpu.memory_space<vmem>>, vector<1x1x128xf32>,
    return
  }
  func.func @transform_0(%arg0: i32) -> (i32, i32) {
    %c0_i32 = arith.constant 0 : i32
    %c0_i32_0 = arith.constant 0 : i32
    return %arg0, %c0_i32 : i32, i32
  }
  func.func @transform_1(%arg0: i32) -> (i32, i32) {
    %c0_i32 = arith.constant 0 : i32
    %c0_i32_0 = arith.constant 0 : i32
    return %c0_i32, %arg0 : i32, i32
  }
  func.func @transform_2(%arg0: i32) -> (i32, i32, i32) {
    %c0_i32 = arith.constant 0 : i32
    %c0_i32_0 = arith.constant 0 : i32
    %c0_i32_1 = arith.constant 0 : i32
    return %arg0, %c0_i32, %c0_i32_0 : i32, i32, i32
  }
}

module attributes {stable_mosaic.version = 11 : i64} {
  func.func @_proto_kernel(%arg0: memref<8x32xf32, #tpu.memory_space<vmem>>, %arg1: memref<1x1xf32, #tpu.memory_space<smem>>) attributes {dimension_semantics = [], scalar_prefetch = 0 : i64, scratch_operands = 0 : i64, tpu.core_type = #tpu.core_type<tc>} {
    %c0 = arith.constant 0 : index
    %c0_0 = arith.constant 0 : index
    %0 = vector.load %arg0[%c0, %c0_0] : memref<8x32xf32, #tpu.memory_space<vmem>>, vector<8x32xf32>
    %cst = arith.constant dense<0.000000e+00> : vector<8x8xf32>
    %1 = tpu.matmul %0, %0, %cst {dimension_numbers = #tpu.dot_dimension_numbers<[1], [1], [0], [0], [0, 0, 1, 0], [], []>} : vector<8x32xf32>, vector<8x32xf32>, vector<8x8xf32> -> vector<8x8xf32>
    %cst_1 = arith.constant 1.400000e-01 : f32
    %2 = vector.broadcast %cst_1 : f32 to vector<8x8xf32>
    %3 = arith.subf %1, %2 : vector<8x8xf32>
    %cst_2 = arith.constant 0.000000e+00 : f32
    %4 = vector.broadcast %cst_2 : f32 to vector<8x8xf32>
    %5 = arith.maximumf %3, %4 : vector<8x8xf32>
    %6 = vector.shape_cast %5 : vector<8x8xf32> to vector<1x8x8xf32>
    %cst_3 = arith.constant dense<0.000000e+00> : vector<1xf32>
    %7 = vector.multi_reduction <add>, %6, %cst_3 [1, 2] : vector<1x8x8xf32> to vector<1xf32>
    %8 = vector.shape_cast %7 : vector<1xf32> to vector<1x1x1xf32>
    %9 = vector.extract %8[0, 0, 0] : f32 from vector<1x1x1xf32>
    %cst_4 = arith.constant 1.562500e-02 : f32
    %10 = arith.mulf %9, %cst_4 : f32
    %c0_5 = arith.constant 0 : index
    %c0_6 = arith.constant 0 : index
    %11 = memref.load %arg1[%c0_5, %c0_6] : memref<1x1xf32, #tpu.memory_space<smem>>
    memref.store %10, %arg1[%c0_5, %c0_6] : memref<1x1xf32, #tpu.memory_space<smem>>
    return
  }
}

</mosaic_0001>

<llo_original>
// kernel: osdan_loss_clsemb.3
$region0: #{osdan_loss_clsemb.3}
  #allocation0 [shape = 'u32[]', space=smem, size = 0x4, offset = 0x4, fixed_abs, tag = 'smem constant byte address 0x4 - core index']
  #allocation1 [shape = 'u32[72,128]{1,0:T(1,128)}', space=vmem, size = 0x9000, scoped, tag = 'internal scratch']
  %s0 = inlined_call_operand.vmem [shape: f32[8,32], index: 0, kind: input, shape index: {}]
  %s1 = inlined_call_operand.hbm [shape: f32[1,1], index: 1, kind: output, shape index: {}]
  %s2 = sld [smem:[#allocation0]]
  $region14: #{osdan_loss_clsemb.3} parent=0
    _
  %s4 = ssub.s32 1, %s2
  %s5 = scalar_select 0, %s4, %s2
  $region1: #{osdan_loss_clsemb.3} parent=0
    #allocation2 [shape = 'u8[512]{0}', space=smem, size = 0x200, scoped, tag = 'output window, operand 0, single buffered']
    #allocation3 [shape = 's32[1]{0}', space=sflag, size = 0x4, scoped, tag = 'scoped memory for osdan_loss_clsemb.3']
    %6 = vsyncpa [#allocation3], 0
    // Predicated region
    $region2: #{osdan_loss_clsemb.3} parent=1 // pred_check
      _
    $region3: #{osdan_loss_clsemb.3} parent=1 // pred_check_branch
      %8 = sbr.rel (0) target = $region5
    $region4: #{osdan_loss_clsemb.3} parent=1 // pred_region
      _
    $region5: #{osdan_loss_clsemb.3} parent=1 // pred_fallthru
      _
    %v9 = vld [vmem:[%s0] sm:$0xff]
    %vm10 = vcmask 261120
    %v12 = vsel %vm10, %v9, 0
    %14 = vmatpush.xpose.msra.mxu0 0.0
    %15 = vmatpush.xpose.msra.mxu0 0.0
    %16 = vmatpush.xpose.msra.mxu0 0.0
    %17 = vmatpush.xpose.msra.mxu0 0.0
    %18 = vmatpush.xpose.msra.mxu0 0.0
    %19 = vmatpush.xpose.msra.mxu0 0.0
    %20 = vmatpush.xpose.msra.mxu0 0.0
    %21 = vmatpush.xpose.msra.mxu0 0.0
    %22 = vmatpush.xpose.msra.mxu0 0.0
    %23 = vmatpush.xpose.msra.mxu0 0.0
    %24 = vmatpush.xpose.msra.mxu0 0.0
    %25 = vmatpush.xpose.msra.mxu0 0.0
    %26 = vmatpush.xpose.msra.mxu0 0.0
    %27 = vmatpush.xpose.msra.mxu0 0.0
    %28 = vmatpush.xpose.msra.mxu0 0.0
    %29 = vmatpush.xpose.msra.mxu0 %v12
    %30 = vmatmul.f32.gmra.mxu0 %v12
    %v31 = vpop.f32.mrf.mxu0
    %v32 = vadd.f32 0.0, %v31
    %33 = vdwg.mxu0
    %v34 = vsub.f32 %v32, 0.14
    %v35 = vmax.f32 %v34, 0.0
    %vm36 = vcmask 64512
    %v37 = vsel %vm36, %v35, 0.0
    %38 = vadd.xlane.f32.xlu0 %v37
    %v39 = vpop.xlane.xlu0 %38
    %v40 = vrot.slane %v39, 4
    %v41 = vadd.f32 %v39, %v40
    %v42 = vrot.slane %v41, 2
    %v43 = vadd.f32 %v41, %v42
    %v44 = vrot.slane %v43, 1
    %v45 = vadd.f32 %v43, %v44
    %s46 = vtos %v45
    %s47 = smul.f32 %s46, 0.015625
    %s48 = scalar_lea.smem [#allocation2], 0
    %49 = sst [smem:[%s48]] %s47
    // Predicated region
    $region6: #{osdan_loss_clsemb.3} parent=1 // pred_check
      _
    $region7: #{osdan_loss_clsemb.3} parent=1 // pred_check_branch
      %51 = sbr.rel (0) target = $region9
    $region8: #{osdan_loss_clsemb.3} parent=1 // pred_region
      %53 = vsyncadd [#allocation3], 0
      %s55 = sshll.u32 %s1, 4
      %s56 = int_to_ptr.hbm [resolvable:$true] %s55
      %58 = dma.smem_to_hbm [#allocation2], 16, %s56, [#allocation3]
    $region9: #{osdan_loss_clsemb.3} parent=1 // pred_fallthru
      _
    // Predicated region
    $region10: #{osdan_loss_clsemb.3} parent=1 // pred_check
      _
    $region11: #{osdan_loss_clsemb.3} parent=1 // pred_check_branch
      %60 = sbr.rel (0) target = $region13
    $region12: #{osdan_loss_clsemb.3} parent=1 // pred_region
      %62 = dma.done [#allocation3], 16
    $region13: #{osdan_loss_clsemb.3} parent=1 // pred_fallthru
      _
    %63 = sfence
    %64 = vsyncpa [#allocation3], 1

// kernel: osdan_loss_clsemb.2
$region0: #{osdan_loss_clsemb.2}
  #allocation0 [shape = 'u32[]', space=smem, size = 0x4, offset = 0x4, fixed_abs, tag = 'smem constant byte address 0x4 - core index']
  #allocation1 [shape = 'u32[72,128]{1,0:T(1,128)}', space=vmem, size = 0x9000, scoped, tag = 'internal scratch']
  %s0 = inlined_call_operand.vmem [shape: f32[16,8], index: 0, kind: input, shape index: {}]
  %s1 = inlined_call_operand.vmem [shape: s32[1,16], index: 1, kind: input, shape index: {}]
  %s2 = inlined_call_operand.vmem [shape: f32[1,1,128], index: 2, kind: output, shape index: {}]
  %s3 = sld [smem:[#allocation0]]
  $region18: #{osdan_loss_clsemb.2} parent=0
    _
  %s5 = ssub.s32 1, %s3
  %s6 = scalar_select 0, %s5, %s3
  // Predicated region
  $region2: #{osdan_loss_clsemb.2} parent=0 // pred_check
    _
  $region3: #{osdan_loss_clsemb.2} parent=0 // pred_check_branch
    %8 = sbr.rel (0) target = $region5
  $region4: #{osdan_loss_clsemb.2} parent=0 // pred_region
    _
  $region5: #{osdan_loss_clsemb.2} parent=0 // pred_fallthru
    _
  // Predicated region
  $region6: #{osdan_loss_clsemb.2} parent=0 // pred_check
    _
  $region7: #{osdan_loss_clsemb.2} parent=0 // pred_check_branch
    %10 = sbr.rel (0) target = $region9
  $region8: #{osdan_loss_clsemb.2} parent=0 // pred_region
    _
  $region9: #{osdan_loss_clsemb.2} parent=0 // pred_fallthru
    _
  %v11 = vld [vmem:[%s0] sm:$0xff]
  %v12 = vld [vmem:[%s0 + $0x8] sm:$0xff]
  %v13 = vld [vmem:[%s0 + $0x10] sm:$0xff]
  %v14 = vld [vmem:[%s0 + $0x18] sm:$0xff]
  %v15 = vld [vmem:[%s0 + $0x20] sm:$0xff]
  %v16 = vld [vmem:[%s0 + $0x28] sm:$0xff]
  %v17 = vld [vmem:[%s0 + $0x30] sm:$0xff]
  %v18 = vld [vmem:[%s0 + $0x38] sm:$0xff]
  %v19 = vld [vmem:[%s0 + $0x40] sm:$0xff]
  %v20 = vld [vmem:[%s0 + $0x48] sm:$0xff]
  %v21 = vld [vmem:[%s0 + $0x50] sm:$0xff]
  %v22 = vld [vmem:[%s0 + $0x58] sm:$0xff]
  %v23 = vld [vmem:[%s0 + $0x60] sm:$0xff]
  %v24 = vld [vmem:[%s0 + $0x68] sm:$0xff]
  %v25 = vld [vmem:[%s0 + $0x70] sm:$0xff]
  %v26 = vld [vmem:[%s0 + $0x78] sm:$0xff]
  %v27 = vlaneseq
  %v28 = vshrl.u32 %v27, 7
  %v29 = vlaneseq
  %v30 = vand.u32 %v29, 127
  %vm31 = vcmp.eq.s32.totalorder %v28, %v30
  %v32 = vsel %vm31, 1, 0
  %v33 = vcvt.s32.f32 %v32
  %vm34 = vcmask 64512
  %v36 = vsel %vm34, %v33, 0
  %v39 = vsel %vm34, %v11, 0
  %v42 = vsel %vm34, %v12, 0
  %v45 = vsel %vm34, %v13, 0
  %v48 = vsel %vm34, %v14, 0
  %v51 = vsel %vm34, %v15, 0
  %v54 = vsel %vm34, %v16, 0
  %v57 = vsel %vm34, %v17, 0
  %v60 = vsel %vm34, %v18, 0
  %v63 = vsel %vm34, %v19, 0
  %v66 = vsel %vm34, %v20, 0
  %v69 = vsel %vm34, %v21, 0
  %v72 = vsel %vm34, %v22, 0
  %v75 = vsel %vm34, %v23, 0
  %v78 = vsel %vm34, %v24, 0
  %v81 = vsel %vm34, %v25, 0
  %v84 = vsel %vm34, %v26, 0
  %v86 = vand.u32 %v84, 4294901760
  %87 = vmatpush.xpose.msra.mxu0 %v86
  %v88 = vand.u32 %v81, 4294901760
  %89 = vmatpush.xpose.msra.mxu0 %v88
  %v90 = vand.u32 %v78, 4294901760
  %91 = vmatpush.xpose.msra.mxu0 %v90
  %v92 = vand.u32 %v75, 4294901760
  %93 = vmatpush.xpose.msra.mxu0 %v92
  %v94 = vand.u32 %v72, 4294901760
  %95 = vmatpush.xpose.msra.mxu0 %v94
  %v96 = vand.u32 %v69, 4294901760
  %97 = vmatpush.xpose.msra.mxu0 %v96
  %v98 = vand.u32 %v66, 4294901760
  %99 = vmatpush.xpose.msra.mxu0 %v98
  %v100 = vand.u32 %v63, 4294901760
  %101 = vmatpush.xpose.msra.mxu0 %v100
  %v102 = vand.u32 %v60, 4294901760
  %103 = vmatpush.xpose.msra.mxu0 %v102
  %v104 = vand.u32 %v57, 4294901760
  %105 = vmatpush.xpose.msra.mxu0 %v104
  %v106 = vand.u32 %v54, 4294901760
  %107 = vmatpush.xpose.msra.mxu0 %v106
  %v108 = vand.u32 %v51, 4294901760
  %109 = vmatpush.xpose.msra.mxu0 %v108
  %v110 = vand.u32 %v48, 4294901760
  %111 = vmatpush.xpose.msra.mxu0 %v110
  %v112 = vand.u32 %v45, 4294901760
  %113 = vmatpush.xpose.msra.mxu0 %v112
  %v114 = vand.u32 %v42, 4294901760
  %115 = vmatpush.xpose.msra.mxu0 %v114
  %v116 = vand.u32 %v39, 4294901760
  %117 = vmatpush.xpose.msra.mxu0 %v116
  %v118 = vand.u32 %v36, 4294901760
  %v119 = vsub.f32 %v36, %v118
  %v120 = vand.u32 %v119, 4294901760
  %v121 = vsub.f32 %v119, %v120
  %v122 = vand.u32 %v121, 4294901760
  %123 = vmatmul.f32.gmra.mxu0 %v122
  %v124 = vpop.f32.mrf.mxu0
  %v125 = vadd.f32 0.0, %v124
  %126 = vdwg.mxu0
  %v127 = vand.u32 %v84, 4294901760
  %v128 = vsub.f32 %v84, %v127
  %v129 = vand.u32 %v128, 4294901760
  %v130 = vsub.f32 %v128, %v129
  %v131 = vand.u32 %v130, 4294901760
  %132 = vmatpush.xpose.msra.mxu0 %v131
  %v133 = vand.u32 %v81, 4294901760
  %v134 = vsub.f32 %v81, %v133
  %v135 = vand.u32 %v134, 4294901760
  %v136 = vsub.f32 %v134, %v135
  %v137 = vand.u32 %v136, 4294901760
  %138 = vmatpush.xpose.msra.mxu0 %v137
  %v139 = vand.u32 %v78, 4294901760
  %v140 = vsub.f32 %v78, %v139
  %v141 = vand.u32 %v140, 4294901760
  %v142 = vsub.f32 %v140, %v141
  %v143 = vand.u32 %v142, 4294901760
  %144 = vmatpush.xpose.msra.mxu0 %v143
  %v145 = vand.u32 %v75, 4294901760
  %v146 = vsub.f32 %v75, %v145
  %v147 = vand.u32 %v146, 4294901760
  %v148 = vsub.f32 %v146, %v147
  %v149 = vand.u32 %v148, 4294901760
  %150 = vmatpush.xpose.msra.mxu0 %v149
  %v151 = vand.u32 %v72, 4294901760
  %v152 = vsub.f32 %v72, %v151
  %v153 = vand.u32 %v152, 4294901760
  %v154 = vsub.f32 %v152, %v153
  %v155 = vand.u32 %v154, 4294901760
  %156 = vmatpush.xpose.msra.mxu0 %v155
  %v157 = vand.u32 %v69, 4294901760
  %v158 = vsub.f32 %v69, %v157
  %v159 = vand.u32 %v158, 4294901760
  %v160 = vsub.f32 %v158, %v159
  %v161 = vand.u32 %v160, 4294901760
  %162 = vmatpush.xpose.msra.mxu0 %v161
  %v163 = vand.u32 %v66, 4294901760
  %v164 = vsub.f32 %v66, %v163
  %v165 = vand.u32 %v164, 4294901760
  %v166 = vsub.f32 %v164, %v165
  %v167 = vand.u32 %v166, 4294901760
  %168 = vmatpush.xpose.msra.mxu0 %v167
  %v169 = vand.u32 %v63, 4294901760
  %v170 = vsub.f32 %v63, %v169
  %v171 = vand.u32 %v170, 4294901760
  %v172 = vsub.f32 %v170, %v171
  %v173 = vand.u32 %v172, 4294901760
  %174 = vmatpush.xpose.msra.mxu0 %v173
  %v175 = vand.u32 %v60, 4294901760
  %v176 = vsub.f32 %v60, %v175
  %v177 = vand.u32 %v176, 4294901760
  %v178 = vsub.f32 %v176, %v177
  %v179 = vand.u32 %v178, 4294901760
  %180 = vmatpush.xpose.msra.mxu0 %v179
  %v181 = vand.u32 %v57, 4294901760
  %v182 = vsub.f32 %v57, %v181
  %v183 = vand.u32 %v182, 4294901760
  %v184 = vsub.f32 %v182, %v183
  %v185 = vand.u32 %v184, 4294901760
  %186 = vmatpush.xpose.msra.mxu0 %v185
  %v187 = vand.u32 %v54, 4294901760
  %v188 = vsub.f32 %v54, %v187
  %v189 = vand.u32 %v188, 4294901760
  %v190 = vsub.f32 %v188, %v189
  %v191 = vand.u32 %v190, 4294901760
  %192 = vmatpush.xpose.msra.mxu0 %v191
  %v193 = vand.u32 %v51, 4294901760
  %v194 = vsub.f32 %v51, %v193
  %v195 = vand.u32 %v194, 4294901760
  %v196 = vsub.f32 %v194, %v195
  %v197 = vand.u32 %v196, 4294901760
  %198 = vmatpush.xpose.msra.mxu0 %v197
  %v199 = vand.u32 %v48, 4294901760
  %v200 = vsub.f32 %v48, %v199
  %v201 = vand.u32 %v200, 4294901760
  %v202 = vsub.f32 %v200, %v201
  %v203 = vand.u32 %v202, 4294901760
  %204 = vmatpush.xpose.msra.mxu0 %v203
  %v205 = vand.u32 %v45, 4294901760
  %v206 = vsub.f32 %v45, %v205
  %v207 = vand.u32 %v206, 4294901760
  %v208 = vsub.f32 %v206, %v207
  %v209 = vand.u32 %v208, 4294901760
  %210 = vmatpush.xpose.msra.mxu0 %v209
  %v211 = vand.u32 %v42, 4294901760
  %v212 = vsub.f32 %v42, %v211
  %v213 = vand.u32 %v212, 4294901760
  %v214 = vsub.f32 %v212, %v213
  %v215 = vand.u32 %v214, 4294901760
  %216 = vmatpush.xpose.msra.mxu0 %v215
  %v217 = vand.u32 %v39, 4294901760
  %v218 = vsub.f32 %v39, %v217
  %v219 = vand.u32 %v218, 4294901760
  %v220 = vsub.f32 %v218, %v219
  %v221 = vand.u32 %v220, 4294901760
  %222 = vmatpush.xpose.msra.mxu0 %v221
  %v223 = vand.u32 %v36, 4294901760
  %224 = vmatmul.f32.gmra.mxu0 %v223
  %v225 = vpop.f32.mrf.mxu0
  %v226 = vadd.f32 %v125, %v225
  %227 = vdwg.mxu0
  %v228 = vand.u32 %v84, 4294901760
  %v229 = vsub.f32 %v84, %v228
  %230 = vmatpush.xpose.msra.mxu0 %v229
  %v231 = vand.u32 %v81, 4294901760
  %v232 = vsub.f32 %v81, %v231
  %233 = vmatpush.xpose.msra.mxu0 %v232
  %v234 = vand.u32 %v78, 4294901760
  %v235 = vsub.f32 %v78, %v234
  %236 = vmatpush.xpose.msra.mxu0 %v235
  %v237 = vand.u32 %v75, 4294901760
  %v238 = vsub.f32 %v75, %v237
  %239 = vmatpush.xpose.msra.mxu0 %v238
  %v240 = vand.u32 %v72, 4294901760
  %v241 = vsub.f32 %v72, %v240
  %242 = vmatpush.xpose.msra.mxu0 %v241
  %v243 = vand.u32 %v69, 4294901760
  %v244 = vsub.f32 %v69, %v243
  %245 = vmatpush.xpose.msra.mxu0 %v244
  %v246 = vand.u32 %v66, 4294901760
  %v247 = vsub.f32 %v66, %v246
  %248 = vmatpush.xpose.msra.mxu0 %v247
  %v249 = vand.u32 %v63, 4294901760
  %v250 = vsub.f32 %v63, %v249
  %251 = vmatpush.xpose.msra.mxu0 %v250
  %v252 = vand.u32 %v60, 4294901760
  %v253 = vsub.f32 %v60, %v252
  %254 = vmatpush.xpose.msra.mxu0 %v253
  %v255 = vand.u32 %v57, 4294901760
  %v256 = vsub.f32 %v57, %v255
  %257 = vmatpush.xpose.msra.mxu0 %v256
  %v258 = vand.u32 %v54, 4294901760
  %v259 = vsub.f32 %v54, %v258
  %260 = vmatpush.xpose.msra.mxu0 %v259
  %v261 = vand.u32 %v51, 4294901760
  %v262 = vsub.f32 %v51, %v261
  %263 = vmatpush.xpose.msra.mxu0 %v262
  %v264 = vand.u32 %v48, 4294901760
  %v265 = vsub.f32 %v48, %v264
  %266 = vmatpush.xpose.msra.mxu0 %v265
  %v267 = vand.u32 %v45, 4294901760
  %v268 = vsub.f32 %v45, %v267
  %269 = vmatpush.xpose.msra.mxu0 %v268
  %v270 = vand.u32 %v42, 4294901760
  %v271 = vsub.f32 %v42, %v270
  %272 = vmatpush.xpose.msra.mxu0 %v271
  %v273 = vand.u32 %v39, 4294901760
  %v274 = vsub.f32 %v39, %v273
  %275 = vmatpush.xpose.msra.mxu0 %v274
  %v276 = vand.u32 %v36, 4294901760
  %v277 = vsub.f32 %v36, %v276
  %278 = vmatmul.f32.gmra.mxu0 %v277
  %v279 = vpop.f32.mrf.mxu0
  %v280 = vadd.f32 %v226, %v279
  %281 = vdwg.mxu0
  %v282 = vand.u32 %v84, 4294901760
  %283 = vmatpush.xpose.msra.mxu0 %v282
  %v284 = vand.u32 %v81, 4294901760
  %285 = vmatpush.xpose.msra.mxu0 %v284
  %v286 = vand.u32 %v78, 4294901760
  %287 = vmatpush.xpose.msra.mxu0 %v286
  %v288 = vand.u32 %v75, 4294901760
  %289 = vmatpush.xpose.msra.mxu0 %v288
  %v290 = vand.u32 %v72, 4294901760
  %291 = vmatpush.xpose.msra.mxu0 %v290
  %v292 = vand.u32 %v69, 4294901760
  %293 = vmatpush.xpose.msra.mxu0 %v292
  %v294 = vand.u32 %v66, 4294901760
  %295 = vmatpush.xpose.msra.mxu0 %v294
  %v296 = vand.u32 %v63, 4294901760
  %297 = vmatpush.xpose.msra.mxu0 %v296
  %v298 = vand.u32 %v60, 4294901760
  %299 = vmatpush.xpose.msra.mxu0 %v298
  %v300 = vand.u32 %v57, 4294901760
  %301 = vmatpush.xpose.msra.mxu0 %v300
  %v302 = vand.u32 %v54, 4294901760
  %303 = vmatpush.xpose.msra.mxu0 %v302
  %v304 = vand.u32 %v51, 4294901760
  %305 = vmatpush.xpose.msra.mxu0 %v304
  %v306 = vand.u32 %v48, 4294901760
  %307 = vmatpush.xpose.msra.mxu0 %v306
  %v308 = vand.u32 %v45, 4294901760
  %309 = vmatpush.xpose.msra.mxu0 %v308
  %v310 = vand.u32 %v42, 4294901760
  %311 = vmatpush.xpose.msra.mxu0 %v310
  %v312 = vand.u32 %v39, 4294901760
  %313 = vmatpush.xpose.msra.mxu0 %v312
  %v314 = vand.u32 %v36, 4294901760
  %v315 = vsub.f32 %v36, %v314
  %v316 = vand.u32 %v315, 4294901760
  %317 = vmatmul.f32.gmra.mxu0 %v316
  %v318 = vpop.f32.mrf.mxu0
  %v319 = vadd.f32 %v280, %v318
  %320 = vdwg.mxu0
  %v321 = vand.u32 %v84, 4294901760
  %v322 = vsub.f32 %v84, %v321
  %v323 = vand.u32 %v322, 4294901760
  %324 = vmatpush.xpose.msra.mxu0 %v323
  %v325 = vand.u32 %v81, 4294901760
  %v326 = vsub.f32 %v81, %v325
  %v327 = vand.u32 %v326, 4294901760
  %328 = vmatpush.xpose.msra.mxu0 %v327
  %v329 = vand.u32 %v78, 4294901760
  %v330 = vsub.f32 %v78, %v329
  %v331 = vand.u32 %v330, 4294901760
  %332 = vmatpush.xpose.msra.mxu0 %v331
  %v333 = vand.u32 %v75, 4294901760
  %v334 = vsub.f32 %v75, %v333
  %v335 = vand.u32 %v334, 4294901760
  %336 = vmatpush.xpose.msra.mxu0 %v335
  %v337 = vand.u32 %v72, 4294901760
  %v338 = vsub.f32 %v72, %v337
  %v339 = vand.u32 %v338, 4294901760
  %340 = vmatpush.xpose.msra.mxu0 %v339
  %v341 = vand.u32 %v69, 4294901760
  %v342 = vsub.f32 %v69, %v341
  %v343 = vand.u32 %v342, 4294901760
  %344 = vmatpush.xpose.msra.mxu0 %v343
  %v345 = vand.u32 %v66, 4294901760
  %v346 = vsub.f32 %v66, %v345
  %v347 = vand.u32 %v346, 4294901760
  %348 = vmatpush.xpose.msra.mxu0 %v347
  %v349 = vand.u32 %v63, 4294901760
  %v350 = vsub.f32 %v63, %v349
  %v351 = vand.u32 %v350, 4294901760
  %352 = vmatpush.xpose.msra.mxu0 %v351
  %v353 = vand.u32 %v60, 4294901760
  %v354 = vsub.f32 %v60, %v353
  %v355 = vand.u32 %v354, 4294901760
  %356 = vmatpush.xpose.msra.mxu0 %v355
  %v357 = vand.u32 %v57, 4294901760
  %v358 = vsub.f32 %v57, %v357
  %v359 = vand.u32 %v358, 4294901760
  %360 = vmatpush.xpose.msra.mxu0 %v359
  %v361 = vand.u32 %v54, 4294901760
  %v362 = vsub.f32 %v54, %v361
  %v363 = vand.u32 %v362, 4294901760
  %364 = vmatpush.xpose.msra.mxu0 %v363
  %v365 = vand.u32 %v51, 4294901760
  %v366 = vsub.f32 %v51, %v365
  %v367 = vand.u32 %v366, 4294901760
  %368 = vmatpush.xpose.msra.mxu0 %v367
  %v369 = vand.u32 %v48, 4294901760
  %v370 = vsub.f32 %v48, %v369
  %v371 = vand.u32 %v370, 4294901760
  %372 = vmatpush.xpose.msra.mxu0 %v371
  %v373 = vand.u32 %v45, 4294901760
  %v374 = vsub.f32 %v45, %v373
  %v375 = vand.u32 %v374, 4294901760
  %376 = vmatpush.xpose.msra.mxu0 %v375
  %v377 = vand.u32 %v42, 4294901760
  %v378 = vsub.f32 %v42, %v377
  %v379 = vand.u32 %v378, 4294901760
  %380 = vmatpush.xpose.msra.mxu0 %v379
  %v381 = vand.u32 %v39, 4294901760
  %v382 = vsub.f32 %v39, %v381
  %v383 = vand.u32 %v382, 4294901760
  %384 = vmatpush.xpose.msra.mxu0 %v383
  %v385 = vand.u32 %v36, 4294901760
  %386 = vmatmul.f32.gmra.mxu0 %v385
  %v387 = vpop.f32.mrf.mxu0
  %v388 = vadd.f32 %v319, %v387
  %389 = vdwg.mxu0
  %v390 = vand.u32 %v84, 4294901760
  %391 = vmatpush.xpose.msra.mxu0 %v390
  %v392 = vand.u32 %v81, 4294901760
  %393 = vmatpush.xpose.msra.mxu0 %v392
  %v394 = vand.u32 %v78, 4294901760
  %395 = vmatpush.xpose.msra.mxu0 %v394
  %v396 = vand.u32 %v75, 4294901760
  %397 = vmatpush.xpose.msra.mxu0 %v396
  %v398 = vand.u32 %v72, 4294901760
  %399 = vmatpush.xpose.msra.mxu0 %v398
  %v400 = vand.u32 %v69, 4294901760
  %401 = vmatpush.xpose.msra.mxu0 %v400
  %v402 = vand.u32 %v66, 4294901760
  %403 = vmatpush.xpose.msra.mxu0 %v402
  %v404 = vand.u32 %v63, 4294901760
  %405 = vmatpush.xpose.msra.mxu0 %v404
  %v406 = vand.u32 %v60, 4294901760
  %407 = vmatpush.xpose.msra.mxu0 %v406
  %v408 = vand.u32 %v57, 4294901760
  %409 = vmatpush.xpose.msra.mxu0 %v408
  %v410 = vand.u32 %v54, 4294901760
  %411 = vmatpush.xpose.msra.mxu0 %v410
  %v412 = vand.u32 %v51, 4294901760
  %413 = vmatpush.xpose.msra.mxu0 %v412
  %v414 = vand.u32 %v48, 4294901760
  %415 = vmatpush.xpose.msra.mxu0 %v414
  %v416 = vand.u32 %v45, 4294901760
  %417 = vmatpush.xpose.msra.mxu0 %v416
  %v418 = vand.u32 %v42, 4294901760
  %419 = vmatpush.xpose.msra.mxu0 %v418
  %v420 = vand.u32 %v39, 4294901760
  %421 = vmatpush.xpose.msra.mxu0 %v420
  %v422 = vand.u32 %v36, 4294901760
  %423 = vmatmul.f32.gmra.mxu0 %v422
  %v424 = vpop.f32.mrf.mxu0
  %v425 = vadd.f32 %v388, %v424
  %426 = vdwg.mxu0
  %v427 = vld [vmem:[%s1] sm:$0x1]
  %v428 = vrot.slane %v425, 4
  %v429 = vmax.f32 %v425, %v428
  %v430 = vrot.slane %v429, 2
  %v431 = vmax.f32 %v429, %v430
  %v432 = vrot.slane %v431, 1
  %v433 = vmax.f32 %v431, %v432
  %v434 = vsub.f32 %v425, %v433
  %v435 = vmul.f32 %v434, 1.442695
  %v436 = vpow.pop %v435
  %v437 = vrot.slane %v436, 4
  %v438 = vadd.f32 %v436, %v437
  %v439 = vrot.slane %v438, 2
  %v440 = vadd.f32 %v438, %v439
  %v441 = vrot.slane %v440, 1
  %v442 = vadd.f32 %v440, %v441
  %v443 = vlog2.pop %v442
  %v444 = vmul.f32 %v443, 0.6931472
  %v445 = vperm.slane %v427, 0
  %vm446 = vcmp.eq.s32.totalorder %v28, %v445
  %v447 = vsel %vm446, %v434, 0.0
  %v448 = vrot.slane %v447, 4
  %v449 = vadd.f32 %v447, %v448
  %v450 = vrot.slane %v449, 2
  %v451 = vadd.f32 %v449, %v450
  %v452 = vrot.slane %v451, 1
  %v453 = vadd.f32 %v451, %v452
  %v454 = vsub.f32 %v453, %v444
  %s455 = smul.u32 0, 128
  %v456 = vstv %s455
  %v457 = vadd.s32 %v456, %v30
  %vm458 = vcmp.lt.s32.totalorder %v457, 16
  %vm459 = vcmp.ne.s32.totalorder %v427, 4294967295
  %vm460 = vmand %vm459, %vm458
  %v461 = vsel %vm460, %v454, 0.0
  %vm462 = vcmask 1040384
  %v463 = vsel %vm462, %v461, 0.0
  %464 = vadd.xlane.f32.xlu0 %v463
  %v465 = vpop.xlane.xlu0 %464
  %v466 = vrot.slane %v465, 4
  %v467 = vadd.f32 %v465, %v466
  %v468 = vrot.slane %v467, 2
  %v469 = vadd.f32 %v467, %v468
  %v470 = vrot.slane %v469, 1
  %v471 = vadd.f32 %v469, %v470
  %s472 = vtos %v471
  %s473 = ssub.f32 0.0, %s472
  %v474 = vsel %vm460, 1.0, 0.0
  %v475 = vsel %vm462, %v474, 0.0
  %476 = vadd.xlane.f32.xlu0 %v475
  %v477 = vpop.xlane.xlu0 %476
  %v478 = vrot.slane %v477, 4
  %v479 = vadd.f32 %v477, %v478
  %v480 = vrot.slane %v479, 2
  %v481 = vadd.f32 %v479, %v480
  %v482 = vrot.slane %v481, 1
  %v483 = vadd.f32 %v481, %v482
  %s484 = vtos %v483
  %vm485 = vcmp.eq.s32.totalorder %v30, 0
  %v486 = vstv %s473
  %vm487 = vcmp.eq.s32.totalorder %v30, 1
  %v488 = vstv %s484
  %v489 = vsel %vm487, %v488, 0.0
  %v490 = vsel %vm485, %v486, %v489
  %491 = vst [vmem:[%s2] sm:$0x1] %v490
  // Predicated region
  $region10: #{osdan_loss_clsemb.2} parent=0 // pred_check
    _
  $region11: #{osdan_loss_clsemb.2} parent=0 // pred_check_branch
    %493 = sbr.rel (0) target = $region13
  $region12: #{osdan_loss_clsemb.2} parent=0 // pred_region
    _
  $region13: #{osdan_loss_clsemb.2} parent=0 // pred_fallthru
    _
  // Predicated region
  $region14: #{osdan_loss_clsemb.2} parent=0 // pred_check
    _
  $region15: #{osdan_loss_clsemb.2} parent=0 // pred_check_branch
    %495 = sbr.rel (0) target = $region17
  $region16: #{osdan_loss_clsemb.2} parent=0 // pred_region
    _
  $region17: #{osdan_loss_clsemb.2} parent=0 // pred_fallthru
    _

</llo_original>
